<compile_context>
chip_gen: v7x
topology: tpu7x:2x2x1
jax: 0.10.0
libtpu: 0.0.40
codegen_flags: <defaults>
</compile_context>

<pallas_src>
import jax
import jax.numpy as jnp
from jax.experimental import pallas as pl
from jax.experimental.pallas import tpu as pltpu


def _lrrnn_step_kernel(a_ref, m_ref, wu_ref, n_ref, h_ref, z_ref, u_ref, z_out_ref):
    """One (batch row, lane tile) of the low-rank RNN forward step.  All f32.

    a_ref  : (dz, 1)   VMEM  per-latent decay A = exp(-exp(decay_param))
    m_ref  : (N, dz)   VMEM  latent -> neuron weights
    wu_ref : (N, du)   VMEM  input  -> neuron weights
    n_ref  : (dz, N)   VMEM  neuron -> latent weights
    h_ref  : (N, 1)    VMEM  neuron bias
    z_ref  : (dz, Lt)  VMEM  latent lane tile (lanes = flattened T*K)
    u_ref  : (du, Lt)  VMEM  raw-input lane tile
    z_out  : (dz, Lt)  VMEM  updated latents
    """
    z = z_ref[...]
    u = u_ref[...]

    # Currents X = m @ z + Wu @ u   (MXU, f32 accumulate; MXU has large slack here).
    x = jnp.dot(m_ref[...], z, preferred_element_type=jnp.float32)
    x = x + jnp.dot(wu_ref[...], u, preferred_element_type=jnp.float32)

    # Rates R = relu(X - h)   (bias subtract on the VPU, off the memory-bound stream).
    r = jnp.maximum(x - h_ref[...], 0.0)

    # z_new = A * z + n @ R  — decay path stays in true f32 (recurrent state).
    nr = jnp.dot(n_ref[...], r, preferred_element_type=jnp.float32)
    z_out_ref[...] = (a_ref[...] * z + nr).astype(z_out_ref.dtype)


def _vmem_capacity_bytes():
    """Physical per-core VMEM, queried at trace time; conservative fallback."""
    try:
        info = pltpu.get_tpu_info()
        for attr in ("vmem_capacity_bytes", "vmem_size_bytes", "vmem_bytes"):
            v = getattr(info, attr, None)
            if v:
                return int(v)
    except Exception:
        pass
    return 64 * 1024 * 1024  # v7x per-TensorCore physical VMEM (smallest of v5e/v6e/v7x)


def _derive_lane_tile(TK, B, dz, du, N, vmem_budget_bytes):
    """Biggest lane tile fitting the VMEM budget: double-buffered in/out blocks plus
    the (N, tile) f32 intermediates (x, r).  Capped at 64K lanes; per-step DMA then
    dwarfs the ~0.35 us/step grid overhead."""
    pad8 = lambda d: -(-d // 8) * 8
    per_lane = 2 * 4 * (pad8(dz) + pad8(du) + pad8(dz))   # z,u in + z out, double-buffered
    per_lane += 2 * 4 * pad8(N)                           # x and r temporaries
    tile = max(128, vmem_budget_bytes // per_lane)
    tile = min(tile, 64 * 1024)
    if tile >= TK:
        tile = TK                                         # single full-extent block per row
    else:
        tile = (tile // 128) * 128                        # lane-dense multiple of 128
    # v7x megacore: make sure >= 2 grid steps exist when there is enough data.
    if B * ((TK + tile - 1) // tile) < 2 and TK >= 256:
        half = (TK + 1) // 2
        tile = ((half + 127) // 128) * 128
    return tile


def lrrnn_forward(z, u, m, wu, n, h, decay_param, *, lane_tile=None):
    """Pallas wrapper. z: (B, dz, T, K), u: (B, du, T, K). Returns (z_new, v_new)."""
    B, dz, T, K = z.shape
    du = u.shape[1]
    N = m.shape[0]
    TK = T * K

    if du == 0:
        # TODO(synk): dedicated no-input kernel; substitute a zero input column instead.
        u = jnp.zeros((B, 1, T, K), jnp.float32)
        wu = jnp.zeros((N, 1), jnp.float32)
        du = 1

    # Free (contiguous) views — no transpose / concat / pad HBM passes.
    z3 = z.reshape(B, dz, TK).astype(jnp.float32)
    u3 = u.reshape(B, du, TK).astype(jnp.float32)

    # Decay: supports scalar (1,1,1,1) or per-latent (1,dz,1,1) parameters.
    A_flat = jnp.exp(-jnp.exp(decay_param.astype(jnp.float32))).reshape(-1)
    if A_flat.size == 1:
        A2 = jnp.broadcast_to(A_flat, (dz,)).reshape(dz, 1)
    elif A_flat.size == dz:
        A2 = A_flat.reshape(dz, 1)
    else:
        raise ValueError("decay_param must have 1 or dz entries")

    m32 = m.astype(jnp.float32)
    wu32 = wu.astype(jnp.float32)
    n32 = n.astype(jnp.float32)
    h2 = h.reshape(N, 1).astype(jnp.float32)

    # Per-generation VMEM sizing (v5e/v6e: 128 MiB, v7x: 64 MiB physical).
    vmem_cap = _vmem_capacity_bytes()
    vmem_limit = max(16 * 2**20, min(vmem_cap * 3 // 4, 96 * 2**20))
    if lane_tile is None:
        lane_tile = _derive_lane_tile(TK, B, dz, du, N, int(vmem_limit * 0.7))
    if lane_tile >= TK:
        lane_tile = TK

    grid = (B, pl.cdiv(TK, lane_tile))

    flops = 2 * B * TK * N * (dz + du + dz)
    bytes_accessed = 4 * B * TK * (dz + du + dz) + 4 * (N * (dz + du) + dz * N + N + dz)

    z_out = pl.pallas_call(
        _lrrnn_step_kernel,
        grid=grid,
        in_specs=[
            pl.BlockSpec(memory_space=pltpu.MemorySpace.VMEM),            # A  (dz, 1)
            pl.BlockSpec(memory_space=pltpu.MemorySpace.VMEM),            # m  (N, dz)
            pl.BlockSpec(memory_space=pltpu.MemorySpace.VMEM),            # Wu (N, du)
            pl.BlockSpec(memory_space=pltpu.MemorySpace.VMEM),            # n  (dz, N)
            pl.BlockSpec(memory_space=pltpu.MemorySpace.VMEM),            # h  (N, 1)
            pl.BlockSpec((None, dz, lane_tile), lambda b, i: (b, 0, i)),  # z lane tile
            pl.BlockSpec((None, du, lane_tile), lambda b, i: (b, 0, i)),  # u lane tile
        ],
        out_specs=pl.BlockSpec((None, dz, lane_tile), lambda b, i: (b, 0, i)),
        out_shape=jax.ShapeDtypeStruct((B, dz, TK), jnp.float32),
        compiler_params=pltpu.CompilerParams(
            dimension_semantics=("parallel", "parallel"),
            vmem_limit_bytes=int(vmem_limit)),
        cost_estimate=pl.CostEstimate(
            flops=int(flops), transcendentals=0, bytes_accessed=int(bytes_accessed)),
    )(A2, m32, wu32, n32, h2, z3, u3)

    # Back to the native PyTorch layout (free reshape, contiguous dims).
    z_new = z_out.reshape(B, dz, T, K)

    # step_input with v == u:  v_new = A*u + (1-A)*u == u  -> alias u, no writeback.
    v_new = u
    return z_new, v_new


def lrrnn_forward_reference(z, u, m, wu, n, h, decay_param):
    """Pure-JAX reference mirroring the PyTorch forward (noise_scale=0, sim_v=False)."""
    A = jnp.exp(-jnp.exp(decay_param))                     # (1,1,1,1)
    v = u
    X = (jnp.einsum('Nz,BzTK->BNTK', m, z)
         + jnp.einsum('Nu,BuTK->BNTK', wu, v))
    R = jnp.maximum(X - h[None, :, None, None], 0.0)       # relu(X - h)
    z_new = A * z + jnp.einsum('zN,BNTK->BzTK', n, R)
    v_new = A * v + (1.0 - A) * u
    return z_new, v_new


if __name__ == "__main__":
    # Small shapes consistent with the module's (B, dim, T, K) convention.
    # Per-batch lane extent T*K = 192 (one full-extent block in the auto-tiled run,
    # a masked partial trailing block in the explicit 128-lane-tile run).
    B, dz, du, N, T, K = 4, 4, 2, 32, 48, 4
    decay = 0.7

    key = jax.random.PRNGKey(0)
    k_m, k_n, k_wu, k_z, k_u = jax.random.split(key, 5)

    # Deterministic parameter init (shapes match Transition.__init__, 'uniform' dist).
    m = jax.random.uniform(k_m, (N, dz), jnp.float32, -1.0, 1.0) / jnp.sqrt(N)
    n = jax.random.uniform(k_n, (dz, N), jnp.float32, -1.0, 1.0) / jnp.sqrt(N)
    wu = jax.random.uniform(k_wu, (N, du), jnp.float32, -1.0, 1.0) / jnp.sqrt(N)
    h = jnp.zeros((N,), jnp.float32)                                   # relu bias
    decay_param = jnp.log(-jnp.log(jnp.ones((1, 1, 1, 1), jnp.float32) * decay))

    z0 = jax.random.normal(k_z, (B, dz, T, K), jnp.float32)
    u0 = jax.random.normal(k_u, (B, du, T, K), jnp.float32)

    # TODO(synk): noise injection path (noise_scale > 0, torch Normal sampling) and the
    # sim_v=True filtered-input dynamics are not implemented; this kernel covers the
    # deterministic noise_scale=0, sim_v=False path of LRRNN.forward.

    z_ref, v_ref = lrrnn_forward_reference(z0, u0, m, wu, n, h, decay_param)

    # Auto-tiled path (VMEM-budget-derived tile -> full TK extent per batch row here).
    z1, v1 = lrrnn_forward(z0, u0, m, wu, n, h, decay_param)
    jax.block_until_ready((z1, v1))
    assert jnp.allclose(z1, z_ref, rtol=1e-5, atol=1e-5), "z mismatch (auto tile)"
    assert jnp.allclose(v1, v_ref, rtol=1e-5, atol=1e-5), "v mismatch (auto tile)"

    # Explicit 128-lane tiles: exercises the cdiv grid with a masked partial last block.
    z2, v2 = lrrnn_forward(z0, u0, m, wu, n, h, decay_param, lane_tile=128)
    jax.block_until_ready((z2, v2))
    assert jnp.allclose(z2, z_ref, rtol=1e-5, atol=1e-5), "z mismatch (128-lane tile)"
    assert jnp.allclose(v2, v_ref, rtol=1e-5, atol=1e-5), "v mismatch (128-lane tile)"

    print("KERNEL_OK")
</pallas_src>

<mosaic_0001>
module attributes {stable_mosaic.version = 11 : i64} {
  func.func @_lrrnn_step_kernel(%arg0: i32, %arg1: i32, %arg2: memref<4x1xf32, #tpu.memory_space<vmem>>, %arg3: memref<32x4xf32, #tpu.memory_space<vmem>>, %arg4: memref<32x2xf32, #tpu.memory_space<vmem>>, %arg5: memref<4x32xf32, #tpu.memory_space<vmem>>, %arg6: memref<32x1xf32, #tpu.memory_space<vmem>>, %arg7: memref<1x4x192xf32, #tpu.memory_space<vmem>>, %arg8: memref<1x2x192xf32, #tpu.memory_space<vmem>>, %arg9: memref<1x4x192xf32, #tpu.memory_space<vmem>>) attributes {dimension_semantics = [#tpu.dimension_semantics<parallel>, #tpu.dimension_semantics<parallel>], iteration_bounds = array<i64: 4, 1>, scalar_prefetch = 0 : i64, scratch_operands = 0 : i64, tpu.core_type = #tpu.core_type<tc>, window_params = [{pipeline_mode = #tpu.pipeline_mode<synchronous>, transform_indices = @transform_0, window_bounds = array<i64: 4, 1>}, {pipeline_mode = #tpu.pipeline_mode<synchronous>, transform_indices = @transform_1, window_bounds = array<i64: 32, 4>}, {pipeline_mode = #tpu.pipeline_mode<synchronous>, transform_indices = @transform_2, window_bounds = array<i64: 32, 2>}, {pipeline_mode = #tpu.pipeline_mode<synchronous>, transform_indices = @transform_3, window_bounds = array<i64: 4, 32>}, {pipeline_mode = #tpu.pipeline_mode<synchronous>, transform_indices = @transform_4, window_bounds = array<i64: 32, 1>}, {transform_indices = @transform_5, window_bounds = array<i64: 1, 4, 192>}, {transform_indices = @transform_6, window_bounds = array<i64: 1, 2, 192>}, {transform_indices = @transform_7, window_bounds = array<i64: 1, 4, 192>}]} {
    %c0 = arith.constant 0 : index
    %c0_0 = arith.constant 0 : index
    %c0_1 = arith.constant 0 : index
    %0 = vector.load %arg7[%c0, %c0_0, %c0_1] : memref<1x4x192xf32, #tpu.memory_space<vmem>>, vector<1x4x192xf32>
    %1 = vector.shape_cast %0 : vector<1x4x192xf32> to vector<4x192xf32>
    %c0_2 = arith.constant 0 : index
    %c0_3 = arith.constant 0 : index
    %c0_4 = arith.constant 0 : index
    %2 = vector.load %arg8[%c0_2, %c0_3, %c0_4] : memref<1x2x192xf32, #tpu.memory_space<vmem>>, vector<1x2x192xf32>
    %3 = vector.shape_cast %2 : vector<1x2x192xf32> to vector<2x192xf32>
    %c0_5 = arith.constant 0 : index
    %c0_6 = arith.constant 0 : index
    %4 = vector.load %arg3[%c0_5, %c0_6] : memref<32x4xf32, #tpu.memory_space<vmem>>, vector<32x4xf32>
    %cst = arith.constant dense<0.000000e+00> : vector<32x192xf32>
    %5 = tpu.matmul %4, %1, %cst {dimension_numbers = #tpu.dot_dimension_numbers<[1], [0], [0], [1], [0, 0, 1, 1], [], []>} : vector<32x4xf32>, vector<4x192xf32>, vector<32x192xf32> -> vector<32x192xf32>
    %c0_7 = arith.constant 0 : index
    %c0_8 = arith.constant 0 : index
    %6 = vector.load %arg4[%c0_7, %c0_8] : memref<32x2xf32, #tpu.memory_space<vmem>>, vector<32x2xf32>
    %cst_9 = arith.constant dense<0.000000e+00> : vector<32x192xf32>
    %7 = tpu.matmul %6, %3, %cst_9 {dimension_numbers = #tpu.dot_dimension_numbers<[1], [0], [0], [1], [0, 0, 1, 1], [], []>} : vector<32x2xf32>, vector<2x192xf32>, vector<32x192xf32> -> vector<32x192xf32>
    %8 = arith.addf %5, %7 : vector<32x192xf32>
    %c0_10 = arith.constant 0 : index
    %c0_11 = arith.constant 0 : index
    %9 = vector.load %arg6[%c0_10, %c0_11] : memref<32x1xf32, #tpu.memory_space<vmem>>, vector<32x1xf32>
    %10 = vector.broadcast %9 : vector<32x1xf32> to vector<32x192xf32>
    %11 = arith.subf %8, %10 : vector<32x192xf32>
    %cst_12 = arith.constant 0.000000e+00 : f32
    %12 = vector.broadcast %cst_12 : f32 to vector<32x192xf32>
    %13 = arith.maximumf %11, %12 : vector<32x192xf32>
    %c0_13 = arith.constant 0 : index
    %c0_14 = arith.constant 0 : index
    %14 = vector.load %arg5[%c0_13, %c0_14] : memref<4x32xf32, #tpu.memory_space<vmem>>, vector<4x32xf32>
    %cst_15 = arith.constant dense<0.000000e+00> : vector<4x192xf32>
    %15 = tpu.matmul %14, %13, %cst_15 {dimension_numbers = #tpu.dot_dimension_numbers<[1], [0], [0], [1], [0, 0, 1, 1], [], []>} : vector<4x32xf32>, vector<32x192xf32>, vector<4x192xf32> -> vector<4x192xf32>
    %c0_16 = arith.constant 0 : index
    %c0_17 = arith.constant 0 : index
    %16 = vector.load %arg2[%c0_16, %c0_17] : memref<4x1xf32, #tpu.memory_space<vmem>>, vector<4x1xf32>
    %17 = vector.broadcast %16 : vector<4x1xf32> to vector<4x192xf32>
    %18 = arith.mulf %17, %1 : vector<4x192xf32>
    %19 = arith.addf %18, %15 : vector<4x192xf32>
    %c0_18 = arith.constant 0 : index
    %c0_19 = arith.constant 0 : index
    %c0_20 = arith.constant 0 : index
    %20 = vector.load %arg9[%c0_18, %c0_19, %c0_20] : memref<1x4x192xf32, #tpu.memory_space<vmem>>, vector<1x4x192xf32>
    %21 = vector.shape_cast %20 : vector<1x4x192xf32> to vector<4x192xf32>
    %22 = vector.shape_cast %19 : vector<4x192xf32> to vector<1x4x192xf32>
    tpu.vector_store %arg9[%c0_18, %c0_19, %c0_20], %22 {strides = array<i32>} : memref<1x4x192xf32, #tpu.memory_space<vmem>>, vector<1x4x192xf32>,
    return
  }
  func.func @transform_0(%arg0: i32, %arg1: i32) -> (i32, i32) {
    %c0_i32 = arith.constant 0 : i32
    %c0_i32_0 = arith.constant 0 : i32
    %c0_i32_1 = arith.constant 0 : i32
    return %c0_i32, %c0_i32_0 : i32, i32
  }
  func.func @transform_1(%arg0: i32, %arg1: i32) -> (i32, i32) {
    %c0_i32 = arith.constant 0 : i32
    %c0_i32_0 = arith.constant 0 : i32
    %c0_i32_1 = arith.constant 0 : i32
    return %c0_i32, %c0_i32_0 : i32, i32
  }
  func.func @transform_2(%arg0: i32, %arg1: i32) -> (i32, i32) {
    %c0_i32 = arith.constant 0 : i32
    %c0_i32_0 = arith.constant 0 : i32
    %c0_i32_1 = arith.constant 0 : i32
    return %c0_i32, %c0_i32_0 : i32, i32
  }
  func.func @transform_3(%arg0: i32, %arg1: i32) -> (i32, i32) {
    %c0_i32 = arith.constant 0 : i32
    %c0_i32_0 = arith.constant 0 : i32
    %c0_i32_1 = arith.constant 0 : i32
    return %c0_i32, %c0_i32_0 : i32, i32
  }
  func.func @transform_4(%arg0: i32, %arg1: i32) -> (i32, i32) {
    %c0_i32 = arith.constant 0 : i32
    %c0_i32_0 = arith.constant 0 : i32
    %c0_i32_1 = arith.constant 0 : i32
    return %c0_i32, %c0_i32_0 : i32, i32
  }
  func.func @transform_5(%arg0: i32, %arg1: i32) -> (i32, i32, i32) {
    %c0_i32 = arith.constant 0 : i32
    %c0_i32_0 = arith.constant 0 : i32
    return %arg0, %c0_i32, %arg1 : i32, i32, i32
  }
  func.func @transform_6(%arg0: i32, %arg1: i32) -> (i32, i32, i32) {
    %c0_i32 = arith.constant 0 : i32
    %c0_i32_0 = arith.constant 0 : i32
    return %arg0, %c0_i32, %arg1 : i32, i32, i32
  }
  func.func @transform_7(%arg0: i32, %arg1: i32) -> (i32, i32, i32) {
    %c0_i32 = arith.constant 0 : i32
    %c0_i32_0 = arith.constant 0 : i32
    return %arg0, %c0_i32, %arg1 : i32, i32, i32
  }
}

</mosaic_0001>

<llo_original>
// kernel: tpu_custom_call.1
$region0: #{tpu_custom_call.1}
  #allocation0 [shape = 'u32[]', space=smem, size = 0x4, offset = 0x4, fixed_abs, tag = 'smem constant byte address 0x4 - core index']
  #allocation1 [shape = 'u32[144,128]{1,0:T(1,128)}', space=vmem, size = 0x12000, scoped, tag = 'internal scratch']
  %s0 = inlined_call_operand.vmem [shape: f32[4,1], index: 0, kind: input, shape index: {}]
  %s1 = inlined_call_operand.vmem [shape: f32[32,4], index: 1, kind: input, shape index: {}]
  %s2 = inlined_call_operand.vmem [shape: f32[32,2], index: 2, kind: input, shape index: {}]
  %s3 = inlined_call_operand.vmem [shape: f32[4,32], index: 3, kind: input, shape index: {}]
  %s4 = inlined_call_operand.vmem [shape: f32[32,1], index: 4, kind: input, shape index: {}]
  %s5 = inlined_call_operand.vmem [shape: f32[4,4,192], index: 5, kind: input, shape index: {}]
  %s6 = inlined_call_operand.vmem [shape: f32[4,2,192], index: 6, kind: input, shape index: {}]
  %s7 = inlined_call_operand.hbm [shape: f32[4,4,192], index: 7, kind: output, shape index: {}]
  %s8 = sld [smem:[#allocation0]]
  $region61: #{tpu_custom_call.1} parent=0
    _
  %s10 = ssub.s32 1, %s8
  %s11 = scalar_select 0, %s10, %s8
  $region1: #{tpu_custom_call.1} parent=0
    #allocation2 [shape = 'u8[8192]{0}', space=vmem, size = 0x2000, scoped, tag = 'output window, operand 0']
    #allocation3 [shape = 's32[2]{0}', space=sflag, size = 0x8, scoped, tag = 'scoped memory for tpu_custom_call.1']
    %12 = vsyncpa [#allocation3], 0
    %s13 = scalar_lea.sflag [#allocation3], 1
    %14 = vsyncpa %s13, 0
    loop: start=0, step=1, limit=6
    $region2: #{tpu_custom_call.1} parent=1 // loop_pre_header
      _
    $region3: #{tpu_custom_call.1} parent=1 // loop_header
      %s16 = sphi 0, %s20
      %p17 = scmp.ge.s32.totalorder %s16, 6
      %s23 = sphi 0, %s35
      %s24 = sphi 0, %s31
      %s25 = sphi 0, %s23
      %s26 = sphi 0, %s24
      %s27 = sphi 0, %s25
      %s28 = sphi 0, %s26
      %s36 = sphi 0, %s36
      %s38 = sphi 0, %s36
      %s39 = sphi 0, %s38
      %s53 = sphi 0, %s39
      %s57 = sphi 0, %s57
      %s59 = sphi 0, %s57
      %s60 = sphi 0, %s59
      %s74 = sphi 0, %s60
      %s78 = sphi 0, %s78
      %s80 = sphi 0, %s78
      %s81 = sphi 0, %s80
      %s95 = sphi 0, %s81
      %s99 = sphi 0, %s99
      %s101 = sphi 0, %s99
      %s102 = sphi 0, %s101
      %s116 = sphi 0, %s102
      %s120 = sphi 0, %s120
      %s122 = sphi 0, %s120
      %s123 = sphi 0, %s122
      %s137 = sphi 0, %s123
      %s145 = sphi 0, %s147
      %s148 = sphi 0, %s145
      %s149 = sphi 0, %s148
      %s165 = sphi 0, %s149
      %s173 = sphi 0, %s175
      %s176 = sphi 0, %s173
      %s177 = sphi 0, %s176
      %s193 = sphi 0, %s177
      %s201 = sphi 0, %s203
      %s204 = sphi 0, %s201
      %s205 = sphi 0, %s204
      %s221 = sphi 0, %s205
    $region4: #{tpu_custom_call.1} parent=1 // loop_header_branch
      %19 = sbr.rel (%p17) target = $region8
    $region5: #{tpu_custom_call.1} parent=1 // loop_body
      %s21 = ssub.s32 %s16, 1
      %s22 = ssub.s32 %s16, 2
      %s29 = sadd.s32 1, %s24
      %p30 = scmp.ge.s32.totalorder %s29, 1
      %s31 = scalar_select %p30, 0, %s29
      %s32 = sadd.s32 1, %s23
      %s33 = scalar_select %p30, %s32, %s23
      %p34 = scmp.ge.s32.totalorder %s33, 4
      %s35 = scalar_select %p34, 0, %s33
      %s37 = sadd.s32 %s36, 1
      %p40 = scmp.eq.s32.totalorder %s16, 3
      %p41 = scmp.ne.s32.totalorder %s36, %s38
      %p42 = scmp.eq.s32.totalorder %s16, 0
      %p43 = por %p41, %p42
      %p44 = scmp.ne.s32.totalorder %s36, %s38
      %p45 = scmp.eq.s32.totalorder %s21, 3
      %p46 = por %p44, %p45
      %p47 = scmp.ne.s32.totalorder %s38, %s39
      %p48 = scmp.eq.s32.totalorder %s21, 0
      %p49 = por %p47, %p48
      %p50 = scmp.ne.s32.totalorder %s38, %s39
      %p51 = scmp.eq.s32.totalorder %s22, 3
      %p52 = por %p50, %p51
      %p54 = scmp.ne.s32.totalorder %s39, %s53
      %p55 = scmp.eq.s32.totalorder %s22, 0
      %p56 = por %p54, %p55
      %s58 = sadd.s32 %s57, 1
      %p61 = scmp.eq.s32.totalorder %s16, 3
      %p62 = scmp.ne.s32.totalorder %s57, %s59
      %p63 = scmp.eq.s32.totalorder %s16, 0
      %p64 = por %p62, %p63
      %p65 = scmp.ne.s32.totalorder %s57, %s59
      %p66 = scmp.eq.s32.totalorder %s21, 3
      %p67 = por %p65, %p66
      %p68 = scmp.ne.s32.totalorder %s59, %s60
      %p69 = scmp.eq.s32.totalorder %s21, 0
      %p70 = por %p68, %p69
      %p71 = scmp.ne.s32.totalorder %s59, %s60
      %p72 = scmp.eq.s32.totalorder %s22, 3
      %p73 = por %p71, %p72
      %p75 = scmp.ne.s32.totalorder %s60, %s74
      %p76 = scmp.eq.s32.totalorder %s22, 0
      %p77 = por %p75, %p76
      %s79 = sadd.s32 %s78, 1
      %p82 = scmp.eq.s32.totalorder %s16, 3
      %p83 = scmp.ne.s32.totalorder %s78, %s80
      %p84 = scmp.eq.s32.totalorder %s16, 0
      %p85 = por %p83, %p84
      %p86 = scmp.ne.s32.totalorder %s78, %s80
      %p87 = scmp.eq.s32.totalorder %s21, 3
      %p88 = por %p86, %p87
      %p89 = scmp.ne.s32.totalorder %s80, %s81
      %p90 = scmp.eq.s32.totalorder %s21, 0
      %p91 = por %p89, %p90
      %p92 = scmp.ne.s32.totalorder %s80, %s81
      %p93 = scmp.eq.s32.totalorder %s22, 3
      %p94 = por %p92, %p93
      %p96 = scmp.ne.s32.totalorder %s81, %s95
      %p97 = scmp.eq.s32.totalorder %s22, 0
      %p98 = por %p96, %p97
      %s100 = sadd.s32 %s99, 1
      %p103 = scmp.eq.s32.totalorder %s16, 3
      %p104 = scmp.ne.s32.totalorder %s99, %s101
      %p105 = scmp.eq.s32.totalorder %s16, 0
      %p106 = por %p104, %p105
      %p107 = scmp.ne.s32.totalorder %s99, %s101
      %p108 = scmp.eq.s32.totalorder %s21, 3
      %p109 = por %p107, %p108
      %p110 = scmp.ne.s32.totalorder %s101, %s102
      %p111 = scmp.eq.s32.totalorder %s21, 0
      %p112 = por %p110, %p111
      %p113 = scmp.ne.s32.totalorder %s101, %s102
      %p114 = scmp.eq.s32.totalorder %s22, 3
      %p115 = por %p113, %p114
      %p117 = scmp.ne.s32.totalorder %s102, %s116
      %p118 = scmp.eq.s32.totalorder %s22, 0
      %p119 = por %p117, %p118
      %s121 = sadd.s32 %s120, 1
      %p124 = scmp.eq.s32.totalorder %s16, 3
      %p125 = scmp.ne.s32.totalorder %s120, %s122
      %p126 = scmp.eq.s32.totalorder %s16, 0
      %p127 = por %p125, %p126
      %p128 = scmp.ne.s32.totalorder %s120, %s122
      %p129 = scmp.eq.s32.totalorder %s21, 3
      %p130 = por %p128, %p129
      %p131 = scmp.ne.s32.totalorder %s122, %s123
      %p132 = scmp.eq.s32.totalorder %s21, 0
      %p133 = por %p131, %p132
      %p134 = scmp.ne.s32.totalorder %s122, %s123
      %p135 = scmp.eq.s32.totalorder %s22, 3
      %p136 = por %p134, %p135
      %p138 = scmp.ne.s32.totalorder %s123, %s137
      %p139 = scmp.eq.s32.totalorder %s22, 0
      %p140 = por %p138, %p139
      %s141 = ssub.s32 %s23, %s35
      %s142 = ssub.s32 %s24, %s31
      %s143 = sor.u32 %s141, %s142
      %p144 = scmp.eq.s32.totalorder %s143, 0
      %s146 = sadd.s32 %s145, 1
      %s147 = scalar_select %p144, %s145, %s146
      %p150 = pneg %p144
      %p151 = scmp.eq.s32.totalorder %s16, 3
      %p152 = por %p150, %p151
      %p153 = scmp.ne.s32.totalorder %s145, %s148
      %p154 = scmp.eq.s32.totalorder %s16, 0
      %p155 = por %p153, %p154
      %p156 = scmp.ne.s32.totalorder %s145, %s148
      %p157 = scmp.eq.s32.totalorder %s21, 3
      %p158 = por %p156, %p157
      %p159 = scmp.ne.s32.totalorder %s148, %s149
      %p160 = scmp.eq.s32.totalorder %s21, 0
      %p161 = por %p159, %p160
      %p162 = scmp.ne.s32.totalorder %s148, %s149
      %p163 = scmp.eq.s32.totalorder %s22, 3
      %p164 = por %p162, %p163
      %p166 = scmp.ne.s32.totalorder %s149, %s165
      %p167 = scmp.eq.s32.totalorder %s22, 0
      %p168 = por %p166, %p167
      %s169 = ssub.s32 %s23, %s35
      %s170 = ssub.s32 %s24, %s31
      %s171 = sor.u32 %s169, %s170
      %p172 = scmp.eq.s32.totalorder %s171, 0
      %s174 = sadd.s32 %s173, 1
      %s175 = scalar_select %p172, %s173, %s174
      %p178 = pneg %p172
      %p179 = scmp.eq.s32.totalorder %s16, 3
      %p180 = por %p178, %p179
      %p181 = scmp.ne.s32.totalorder %s173, %s176
      %p182 = scmp.eq.s32.totalorder %s16, 0
      %p183 = por %p181, %p182
      %p184 = scmp.ne.s32.totalorder %s173, %s176
      %p185 = scmp.eq.s32.totalorder %s21, 3
      %p186 = por %p184, %p185
      %p187 = scmp.ne.s32.totalorder %s176, %s177
      %p188 = scmp.eq.s32.totalorder %s21, 0
      %p189 = por %p187, %p188
      %p190 = scmp.ne.s32.totalorder %s176, %s177
      %p191 = scmp.eq.s32.totalorder %s22, 3
      %p192 = por %p190, %p191
      %p194 = scmp.ne.s32.totalorder %s177, %s193
      %p195 = scmp.eq.s32.totalorder %s22, 0
      %p196 = por %p194, %p195
      %s197 = ssub.s32 %s23, %s35
      %s198 = ssub.s32 %s24, %s31
      %s199 = sor.u32 %s197, %s198
      %p200 = scmp.eq.s32.totalorder %s199, 0
      %s202 = sadd.s32 %s201, 1
      %s203 = scalar_select %p200, %s201, %s202
      %p206 = pneg %p200
      %p207 = scmp.eq.s32.totalorder %s16, 3
      %p208 = por %p206, %p207
      %p209 = scmp.ne.s32.totalorder %s201, %s204
      %p210 = scmp.eq.s32.totalorder %s16, 0
      %p211 = por %p209, %p210
      %p212 = scmp.ne.s32.totalorder %s201, %s204
      %p213 = scmp.eq.s32.totalorder %s21, 3
      %p214 = por %p212, %p213
      %p215 = scmp.ne.s32.totalorder %s204, %s205
      %p216 = scmp.eq.s32.totalorder %s21, 0
      %p217 = por %p215, %p216
      %p218 = scmp.ne.s32.totalorder %s204, %s205
      %p219 = scmp.eq.s32.totalorder %s22, 3
      %p220 = por %p218, %p219
      %p222 = scmp.ne.s32.totalorder %s205, %s221
      %p223 = scmp.eq.s32.totalorder %s22, 0
      %p224 = por %p222, %p223
      %p225 = scmp.le.s32.totalorder 1, %s16
      %p226 = scmp.lt.s32.totalorder %s16, 5
      %p227 = pnand %p225, %p226
      %p228 = pneg %p227
      // Predicated region
      $region9: #{tpu_custom_call.1} parent=5 // pred_check
        _
      $region10: #{tpu_custom_call.1} parent=5 // pred_check_branch
        %230 = sbr.rel (%p227) target = $region12
      $region11: #{tpu_custom_call.1} parent=5 // pred_region
        %s231 = ssub.s32 %s16, 1
        // Predicated region
        $region13: #{tpu_custom_call.1} parent=11 // pred_check
          %p232 = pneg %p49
        $region14: #{tpu_custom_call.1} parent=11 // pred_check_branch
          %234 = sbr.rel (%p232) target = $region16
        $region15: #{tpu_custom_call.1} parent=11 // pred_region
          _
        $region16: #{tpu_custom_call.1} parent=11 // pred_fallthru
          _
        // Predicated region
        $region17: #{tpu_custom_call.1} parent=11 // pred_check
          %p235 = pneg %p70
        $region18: #{tpu_custom_call.1} parent=11 // pred_check_branch
          %237 = sbr.rel (%p235) target = $region20
        $region19: #{tpu_custom_call.1} parent=11 // pred_region
          _
        $region20: #{tpu_custom_call.1} parent=11 // pred_fallthru
          _
        // Predicated region
        $region21: #{tpu_custom_call.1} parent=11 // pred_check
          %p238 = pneg %p91
        $region22: #{tpu_custom_call.1} parent=11 // pred_check_branch
          %240 = sbr.rel (%p238) target = $region24
        $region23: #{tpu_custom_call.1} parent=11 // pred_region
          _
        $region24: #{tpu_custom_call.1} parent=11 // pred_fallthru
          _
        // Predicated region
        $region25: #{tpu_custom_call.1} parent=11 // pred_check
          %p241 = pneg %p112
        $region26: #{tpu_custom_call.1} parent=11 // pred_check_branch
          %243 = sbr.rel (%p241) target = $region28
        $region27: #{tpu_custom_call.1} parent=11 // pred_region
          _
        $region28: #{tpu_custom_call.1} parent=11 // pred_fallthru
          _
        // Predicated region
        $region29: #{tpu_custom_call.1} parent=11 // pred_check
          %p244 = pneg %p133
        $region30: #{tpu_custom_call.1} parent=11 // pred_check_branch
          %246 = sbr.rel (%p244) target = $region32
        $region31: #{tpu_custom_call.1} parent=11 // pred_region
          _
        $region32: #{tpu_custom_call.1} parent=11 // pred_fallthru
          _
      $region12: #{tpu_custom_call.1} parent=5 // pred_fallthru
        _
      %p247 = scmp.lt.s32.totalorder %s16, 4
      // Predicated region
      $region33: #{tpu_custom_call.1} parent=5 // pred_check
        %p248 = pneg %p247
      $region34: #{tpu_custom_call.1} parent=5 // pred_check_branch
        %250 = sbr.rel (%p248) target = $region36
      $region35: #{tpu_custom_call.1} parent=5 // pred_region
        // Predicated region
        $region37: #{tpu_custom_call.1} parent=35 // pred_check
          %p251 = pneg %p155
        $region38: #{tpu_custom_call.1} parent=35 // pred_check_branch
          %253 = sbr.rel (%p251) target = $region40
        $region39: #{tpu_custom_call.1} parent=35 // pred_region
          %s254 = smul.u32 2, %s24
          %p255 = scmp.lt.s32.totalorder %s23, 3
          %s256 = scalar_select %p255, %s23, 3
          %p257 = scmp.lt.s32.totalorder %s254, 1
          %s258 = scalar_select %p257, %s254, 1
          %s259 = smul.addr %s256, 2
          %s260 = sadd.s32 %s258, %s259
          %s261 = smul.addr %s260, 4
          %s262 = scalar_lea.vmem %s5, %s261
          %s263 = smul.u32 2, %s24
        $region40: #{tpu_custom_call.1} parent=35 // pred_fallthru
          _
        // Predicated region
        $region41: #{tpu_custom_call.1} parent=35 // pred_check
          %p264 = pneg %p183
        $region42: #{tpu_custom_call.1} parent=35 // pred_check_branch
          %266 = sbr.rel (%p264) target = $region44
        $region43: #{tpu_custom_call.1} parent=35 // pred_region
          %s267 = smul.u32 2, %s24
          %p268 = scmp.lt.s32.totalorder %s23, 3
          %s269 = scalar_select %p268, %s23, 3
          %p270 = scmp.lt.s32.totalorder %s267, 1
          %s271 = scalar_select %p270, %s267, 1
          %s272 = smul.addr %s269, 2
          %s273 = sadd.s32 %s271, %s272
          %s274 = smul.addr %s273, 2
          %s275 = scalar_lea.vmem %s6, %s274
          %s276 = smul.u32 2, %s24
        $region44: #{tpu_custom_call.1} parent=35 // pred_fallthru
          _
      $region36: #{tpu_custom_call.1} parent=5 // pred_fallthru
        _
      %p277 = scmp.le.s32.totalorder 1, %s16
      %p278 = scmp.lt.s32.totalorder %s16, 5
      %p279 = pnand %p277, %p278
      %p280 = pneg %p279
      // Predicated region
      $region45: #{tpu_custom_call.1} parent=5 // pred_check
        _
      $region46: #{tpu_custom_call.1} parent=5 // pred_check_branch
        %282 = sbr.rel (%p279) target = $region48
      $region47: #{tpu_custom_call.1} parent=5 // pred_region
        %s283 = ssub.s32 %s16, 1
        %p284 = pneg %p49
        %p285 = pneg %p46
        %p286 = pneg %p70
        %p287 = pneg %p67
        %p288 = pneg %p91
        %p289 = pneg %p88
        %p290 = pneg %p112
        %p291 = pneg %p109
        %p292 = pneg %p133
        %p293 = pneg %p130
        %s294 = smul.u32 2, %s26
        %p295 = scmp.lt.s32.totalorder %s25, 3
        %s296 = scalar_select %p295, %s25, 3
        %p297 = scmp.lt.s32.totalorder %s294, 1
        %s298 = scalar_select %p297, %s294, 1
        %s299 = smul.addr %s296, 2
        %s300 = sadd.s32 %s298, %s299
        %s301 = smul.addr %s300, 4
        %s302 = scalar_lea.vmem %s5, %s301
        %p303 = pneg %p161
        %p304 = pneg %p158
        %s305 = smul.u32 2, %s26
        %p306 = scmp.lt.s32.totalorder %s25, 3
        %s307 = scalar_select %p306, %s25, 3
        %p308 = scmp.lt.s32.totalorder %s305, 1
        %s309 = scalar_select %p308, %s305, 1
        %s310 = smul.addr %s307, 2
        %s311 = sadd.s32 %s309, %s310
        %s312 = smul.addr %s311, 2
        %s313 = scalar_lea.vmem %s6, %s312
        %p314 = pneg %p189
        %p315 = pneg %p186
        %p316 = pneg %p217
        %p317 = pneg %p214
        %s318 = sand.u32 %s204, 1
        %s319 = scalar_lea.sflag [#allocation3], %s318
        %s320 = sand.u32 %s204, 1
        %s321 = smul.addr %s320, 8
        %s322 = scalar_lea.vmem [#allocation2], %s321
        %s323 = smul.u32 2, %s26
        %p324 = scmp.lt.s32.totalorder %s25, 3
        %s325 = scalar_select %p324, %s25, 3
        %p326 = scmp.lt.s32.totalorder %s323, 1
        %s327 = scalar_select %p326, %s323, 1
        %s328 = smul.addr %s325, 2
        %s329 = sadd.s32 %s327, %s328
        %s330 = smul.addr %s329, 4
        %s331 = scalar_lea.vmem %s5, %s330
        %s332 = smul.u32 2, %s26
        %s333 = smul.u32 2, %s26
        %p334 = scmp.lt.s32.totalorder %s25, 3
        %s335 = scalar_select %p334, %s25, 3
        %p336 = scmp.lt.s32.totalorder %s333, 1
        %s337 = scalar_select %p336, %s333, 1
        %s338 = smul.addr %s335, 2
        %s339 = sadd.s32 %s337, %s338
        %s340 = smul.addr %s339, 2
        %s341 = scalar_lea.vmem %s6, %s340
        %s342 = smul.u32 2, %s26
        %s343 = smul.u32 2, %s26
        %v344 = vld [vmem:[%s331] sm:$0xff]
        %v345 = vld [vmem:[%s341] sm:$0xf]
        %v346 = vld [vmem:[%s1] sm:$0xff]
        %v347 = vld [vmem:[%s1 + $0x8] sm:$0xff]
        %v348 = vld [vmem:[%s1 + $0x10] sm:$0xff]
        %v349 = vld [vmem:[%s1 + $0x18] sm:$0xff]
        %v350 = vld [vmem:[%s2] sm:$0xff]
        %v351 = vld [vmem:[%s2 + $0x8] sm:$0xff]
        %v352 = vld [vmem:[%s2 + $0x10] sm:$0xff]
        %v353 = vld [vmem:[%s2 + $0x18] sm:$0xff]
        %v356 = vunpack.c.l.s4 1983009808
        %v357 = vunpack.c.0.s8 %v356
        %v358 = vlaneseq
        %v359 = vshrl.u32 %v358, 7
        %v360 = vsub.s32 %v357, %v359
        %v361 = vrot.slane %v345, %v360
        %v362 = vcombine.high %v361, %v361
        %vm363 = vcmask 15360
        %v365 = vsel %vm363, %v350, 0
        %v368 = vsel %vm363, %v351, 0
        %v371 = vsel %vm363, %v352, 0
        %v374 = vsel %vm363, %v353, 0
        %vm376 = vcmask 1041408
        %v377 = vsel %vm376, %v361, 0
        %v379 = vsel %vm376, %v362, 0
        %381 = vmatprep.subr.mxu0 %v379
        %382 = vmatpush1.msra.mxu0 %v377
        %383 = vmatprep.subr.mxu0 0.0
        %384 = vmatpush1.msra.mxu0 0.0
        %385 = vmatprep.subr.mxu0 0.0
        %386 = vmatpush1.msra.mxu0 0.0
        %387 = vmatprep.subr.mxu0 0.0
        %388 = vmatpush1.msra.mxu0 0.0
        %389 = vmatprep.subr.mxu0 0.0
        %390 = vmatpush1.msra.mxu0 0.0
        %391 = vmatprep.subr.mxu0 0.0
        %392 = vmatpush1.msra.mxu0 0.0
        %393 = vmatprep.subr.mxu0 0.0
        %394 = vmatpush1.msra.mxu0 0.0
        %395 = vmatprep.subr.mxu0 0.0
        %396 = vmatpush1.msra.mxu0 0.0
        %397 = vmatprep.subr.mxu0 0.0
        %398 = vmatpush1.msra.mxu0 0.0
        %399 = vmatprep.subr.mxu0 0.0
        %400 = vmatpush1.msra.mxu0 0.0
        %401 = vmatprep.subr.mxu0 0.0
        %402 = vmatpush1.msra.mxu0 0.0
        %403 = vmatprep.subr.mxu0 0.0
        %404 = vmatpush1.msra.mxu0 0.0
        %405 = vmatprep.subr.mxu0 0.0
        %406 = vmatpush1.msra.mxu0 0.0
        %407 = vmatprep.subr.mxu0 0.0
        %408 = vmatpush1.msra.mxu0 0.0
        %409 = vmatprep.subr.mxu0 0.0
        %410 = vmatpush1.msra.mxu0 0.0
        %411 = vmatprep.subr.mxu0 0.0
        %412 = vmatpush1.msra.mxu0 0.0
        %413 = vmatprep.subr.mxu0 0.0
        %414 = vmatpush1.msra.mxu0 0.0
        %415 = vmatprep.subr.mxu0 0.0
        %416 = vmatpush1.msra.mxu0 0.0
        %417 = vmatprep.subr.mxu0 0.0
        %418 = vmatpush1.msra.mxu0 0.0
        %419 = vmatprep.subr.mxu0 0.0
        %420 = vmatpush1.msra.mxu0 0.0
        %421 = vmatprep.subr.mxu0 0.0
        %422 = vmatpush1.msra.mxu0 0.0
        %423 = vmatprep.subr.mxu0 0.0
        %424 = vmatpush1.msra.mxu0 0.0
        %425 = vmatprep.subr.mxu0 0.0
        %426 = vmatpush1.msra.mxu0 0.0
        %427 = vmatprep.subr.mxu0 0.0
        %428 = vmatpush1.msra.mxu0 0.0
        %429 = vmatprep.subr.mxu0 0.0
        %430 = vmatpush1.msra.mxu0 0.0
        %431 = vmatprep.subr.mxu0 0.0
        %432 = vmatpush1.msra.mxu0 0.0
        %433 = vmatprep.subr.mxu0 0.0
        %434 = vmatpush1.msra.mxu0 0.0
        %435 = vmatprep.subr.mxu0 0.0
        %436 = vmatpush1.msra.mxu0 0.0
        %437 = vmatprep.subr.mxu0 0.0
        %438 = vmatpush1.msra.mxu0 0.0
        %439 = vmatprep.subr.mxu0 0.0
        %440 = vmatpush1.msra.mxu0 0.0
        %441 = vmatprep.subr.mxu0 0.0
        %442 = vmatpush1.msra.mxu0 0.0
        %443 = vmatprep.subr.mxu0 0.0
        %444 = vmatpush1.msra.mxu0 0.0
        %445 = vmatprep.mubr.f32.mxu0 0.0
        %446 = vmatmul.mubr.f32.gmra.mrb[0].mxu0 %v365
        %v447 = vpop.f32.mrb[0].mxu0
        %v448 = vadd.f32 0.0, %v447
        %v449 = vpop.f32.mrb[0].mxu0
        %v450 = vadd.f32 0.0, %v449
        %451 = vmatprep.mubr.f32.mxu0 0.0
        %452 = vmatmul.mubr.f32.gmra.mrb[0].mxu0 %v368
        %v453 = vpop.f32.mrb[0].mxu0
        %v454 = vadd.f32 0.0, %v453
        %v455 = vpop.f32.mrb[0].mxu0
        %v456 = vadd.f32 0.0, %v455
        %457 = vmatprep.mubr.f32.mxu0 0.0
        %458 = vmatmul.mubr.f32.gmra.mrb[0].mxu0 %v371
        %v459 = vpop.f32.mrb[0].mxu0
        %v460 = vadd.f32 0.0, %v459
        %v461 = vpop.f32.mrb[0].mxu0
        %v462 = vadd.f32 0.0, %v461
        %463 = vmatprep.mubr.f32.mxu0 0.0
        %464 = vmatmul.mubr.f32.gmra.mrb[0].mxu0 %v374
        %v465 = vpop.f32.mrb[0].mxu0
        %v466 = vadd.f32 0.0, %v465
        %v467 = vpop.f32.mrb[0].mxu0
        %v468 = vadd.f32 0.0, %v467
        %469 = vdwg.mxu0
        %v471 = vcombine.high %v344, %v344
        %vm472 = vcmask 31744
        %v474 = vsel %vm472, %v346, 0
        %v477 = vsel %vm472, %v347, 0
        %v480 = vsel %vm472, %v348, 0
        %v483 = vsel %vm472, %v349, 0
        %vm485 = vcmask 1043456
        %v486 = vsel %vm485, %v344, 0
        %v488 = vsel %vm485, %v471, 0
        %490 = vmatprep.subr.mxu0 %v488
        %491 = vmatpush1.msra.mxu0 %v486
        %492 = vmatprep.subr.mxu0 0.0
        %493 = vmatpush1.msra.mxu0 0.0
        %494 = vmatprep.subr.mxu0 0.0
        %495 = vmatpush1.msra.mxu0 0.0
        %496 = vmatprep.subr.mxu0 0.0
        %497 = vmatpush1.msra.mxu0 0.0
        %498 = vmatprep.subr.mxu0 0.0
        %499 = vmatpush1.msra.mxu0 0.0
        %500 = vmatprep.subr.mxu0 0.0
        %501 = vmatpush1.msra.mxu0 0.0
        %502 = vmatprep.subr.mxu0 0.0
        %503 = vmatpush1.msra.mxu0 0.0
        %504 = vmatprep.subr.mxu0 0.0
        %505 = vmatpush1.msra.mxu0 0.0
        %506 = vmatprep.subr.mxu0 0.0
        %507 = vmatpush1.msra.mxu0 0.0
        %508 = vmatprep.subr.mxu0 0.0
        %509 = vmatpush1.msra.mxu0 0.0
        %510 = vmatprep.subr.mxu0 0.0
        %511 = vmatpush1.msra.mxu0 0.0
        %512 = vmatprep.subr.mxu0 0.0
        %513 = vmatpush1.msra.mxu0 0.0
        %514 = vmatprep.subr.mxu0 0.0
        %515 = vmatpush1.msra.mxu0 0.0
        %516 = vmatprep.subr.mxu0 0.0
        %517 = vmatpush1.msra.mxu0 0.0
        %518 = vmatprep.subr.mxu0 0.0
        %519 = vmatpush1.msra.mxu0 0.0
        %520 = vmatprep.subr.mxu0 0.0
        %521 = vmatpush1.msra.mxu0 0.0
        %522 = vmatprep.subr.mxu0 0.0
        %523 = vmatpush1.msra.mxu0 0.0
        %524 = vmatprep.subr.mxu0 0.0
        %525 = vmatpush1.msra.mxu0 0.0
        %526 = vmatprep.subr.mxu0 0.0
        %527 = vmatpush1.msra.mxu0 0.0
        %528 = vmatprep.subr.mxu0 0.0
        %529 = vmatpush1.msra.mxu0 0.0
        %530 = vmatprep.subr.mxu0 0.0
        %531 = vmatpush1.msra.mxu0 0.0
        %532 = vmatprep.subr.mxu0 0.0
        %533 = vmatpush1.msra.mxu0 0.0
        %534 = vmatprep.subr.mxu0 0.0
        %535 = vmatpush1.msra.mxu0 0.0
        %536 = vmatprep.subr.mxu0 0.0
        %537 = vmatpush1.msra.mxu0 0.0
        %538 = vmatprep.subr.mxu0 0.0
        %539 = vmatpush1.msra.mxu0 0.0
        %540 = vmatprep.subr.mxu0 0.0
        %541 = vmatpush1.msra.mxu0 0.0
        %542 = vmatprep.subr.mxu0 0.0
        %543 = vmatpush1.msra.mxu0 0.0
        %544 = vmatprep.subr.mxu0 0.0
        %545 = vmatpush1.msra.mxu0 0.0
        %546 = vmatprep.subr.mxu0 0.0
        %547 = vmatpush1.msra.mxu0 0.0
        %548 = vmatprep.subr.mxu0 0.0
        %549 = vmatpush1.msra.mxu0 0.0
        %550 = vmatprep.subr.mxu0 0.0
        %551 = vmatpush1.msra.mxu0 0.0
        %552 = vmatprep.subr.mxu0 0.0
        %553 = vmatpush1.msra.mxu0 0.0
        %554 = vmatprep.mubr.f32.mxu0 0.0
        %555 = vmatmul.mubr.f32.gmra.mrb[0].mxu0 %v474
        %v556 = vpop.f32.mrb[0].mxu0
        %v557 = vadd.f32 %v448, %v556
        %v558 = vpop.f32.mrb[0].mxu0
        %v559 = vadd.f32 %v450, %v558
        %560 = vmatprep.mubr.f32.mxu0 0.0
        %561 = vmatmul.mubr.f32.gmra.mrb[0].mxu0 %v477
        %v562 = vpop.f32.mrb[0].mxu0
        %v563 = vadd.f32 %v454, %v562
        %v564 = vpop.f32.mrb[0].mxu0
        %v565 = vadd.f32 %v456, %v564
        %566 = vmatprep.mubr.f32.mxu0 0.0
        %567 = vmatmul.mubr.f32.gmra.mrb[0].mxu0 %v480
        %v568 = vpop.f32.mrb[0].mxu0
        %v569 = vadd.f32 %v460, %v568
        %v570 = vpop.f32.mrb[0].mxu0
        %v571 = vadd.f32 %v462, %v570
        %572 = vmatprep.mubr.f32.mxu0 0.0
        %573 = vmatmul.mubr.f32.gmra.mrb[0].mxu0 %v483
        %v574 = vpop.f32.mrb[0].mxu0
        %v575 = vadd.f32 %v466, %v574
        %v576 = vpop.f32.mrb[0].mxu0
        %v577 = vadd.f32 %v468, %v576
        %578 = vdwg.mxu0
        %v579 = vld [vmem:[%s4] sm:$0xff]
        %v580 = vld [vmem:[%s4 + $0x8] sm:$0xff]
        %v581 = vld [vmem:[%s4 + $0x10] sm:$0xff]
        %v582 = vld [vmem:[%s4 + $0x18] sm:$0xff]
        %584 = vset.pattern.permute.xlu0 0
        %585 = vperm.xlu0 %584, %v579
        %v586 = vpop.permute.xlu0 %585
        %589 = vset.pattern.permute.xlu0 0
        %590 = vperm.xlu0 %589, %v580
        %v591 = vpop.permute.xlu0 %590
        %594 = vset.pattern.permute.xlu0 0
        %595 = vperm.xlu0 %594, %v581
        %v596 = vpop.permute.xlu0 %595
        %599 = vset.pattern.permute.xlu0 0
        %600 = vperm.xlu0 %599, %v582
        %v601 = vpop.permute.xlu0 %600
        %v603 = vsub.f32 %v557, %v586
        %v604 = vsub.f32 %v559, %v586
        %v605 = vsub.f32 %v563, %v591
        %v606 = vsub.f32 %v565, %v591
        %v607 = vsub.f32 %v569, %v596
        %v608 = vsub.f32 %v571, %v596
        %v609 = vsub.f32 %v575, %v601
        %v610 = vsub.f32 %v577, %v601
        %v611 = vmax.f32 %v603, 0.0
        %v612 = vmax.f32 %v604, 0.0
        %v613 = vmax.f32 %v605, 0.0
        %v614 = vmax.f32 %v606, 0.0
        %v615 = vmax.f32 %v607, 0.0
        %v616 = vmax.f32 %v608, 0.0
        %v617 = vmax.f32 %v609, 0.0
        %v618 = vmax.f32 %v610, 0.0
        %v619 = vld [vmem:[%s3] sm:$0xf]
        %vm620 = vcmask 261120
        %v622 = vsel %vm620, %v619, 0
        %624 = vmatprep.subr.mxu0 %v612
        %625 = vmatpush1.msra.mxu0 %v611
        %626 = vmatprep.subr.mxu0 %v614
        %627 = vmatpush1.msra.mxu0 %v613
        %628 = vmatprep.subr.mxu0 %v616
        %629 = vmatpush1.msra.mxu0 %v615
        %630 = vmatprep.subr.mxu0 %v618
        %631 = vmatpush1.msra.mxu0 %v617
        %632 = vmatprep.subr.mxu0 0.0
        %633 = vmatpush1.msra.mxu0 0.0
        %634 = vmatprep.subr.mxu0 0.0
        %635 = vmatpush1.msra.mxu0 0.0
        %636 = vmatprep.subr.mxu0 0.0
        %637 = vmatpush1.msra.mxu0 0.0
        %638 = vmatprep.subr.mxu0 0.0
        %639 = vmatpush1.msra.mxu0 0.0
        %640 = vmatprep.subr.mxu0 0.0
        %641 = vmatpush1.msra.mxu0 0.0
        %642 = vmatprep.subr.mxu0 0.0
        %643 = vmatpush1.msra.mxu0 0.0
        %644 = vmatprep.subr.mxu0 0.0
        %645 = vmatpush1.msra.mxu0 0.0
        %646 = vmatprep.subr.mxu0 0.0
        %647 = vmatpush1.msra.mxu0 0.0
        %648 = vmatprep.subr.mxu0 0.0
        %649 = vmatpush1.msra.mxu0 0.0
        %650 = vmatprep.subr.mxu0 0.0
        %651 = vmatpush1.msra.mxu0 0.0
        %652 = vmatprep.subr.mxu0 0.0
        %653 = vmatpush1.msra.mxu0 0.0
        %654 = vmatprep.subr.mxu0 0.0
        %655 = vmatpush1.msra.mxu0 0.0
        %656 = vmatprep.subr.mxu0 0.0
        %657 = vmatpush1.msra.mxu0 0.0
        %658 = vmatprep.subr.mxu0 0.0
        %659 = vmatpush1.msra.mxu0 0.0
        %660 = vmatprep.subr.mxu0 0.0
        %661 = vmatpush1.msra.mxu0 0.0
        %662 = vmatprep.subr.mxu0 0.0
        %663 = vmatpush1.msra.mxu0 0.0
        %664 = vmatprep.subr.mxu0 0.0
        %665 = vmatpush1.msra.mxu0 0.0
        %666 = vmatprep.subr.mxu0 0.0
        %667 = vmatpush1.msra.mxu0 0.0
        %668 = vmatprep.subr.mxu0 0.0
        %669 = vmatpush1.msra.mxu0 0.0
        %670 = vmatprep.subr.mxu0 0.0
        %671 = vmatpush1.msra.mxu0 0.0
        %672 = vmatprep.subr.mxu0 0.0
        %673 = vmatpush1.msra.mxu0 0.0
        %674 = vmatprep.subr.mxu0 0.0
        %675 = vmatpush1.msra.mxu0 0.0
        %676 = vmatprep.subr.mxu0 0.0
        %677 = vmatpush1.msra.mxu0 0.0
        %678 = vmatprep.subr.mxu0 0.0
        %679 = vmatpush1.msra.mxu0 0.0
        %680 = vmatprep.subr.mxu0 0.0
        %681 = vmatpush1.msra.mxu0 0.0
        %682 = vmatprep.subr.mxu0 0.0
        %683 = vmatpush1.msra.mxu0 0.0
        %684 = vmatprep.subr.mxu0 0.0
        %685 = vmatpush1.msra.mxu0 0.0
        %686 = vmatprep.subr.mxu0 0.0
        %687 = vmatpush1.msra.mxu0 0.0
        %688 = vmatprep.mubr.f32.mxu0 0.0
        %689 = vmatmul.mubr.f32.gmra.mrb[0].mxu0 %v622
        %v690 = vpop.f32.mrb[0].mxu0
        %v691 = vadd.f32 0.0, %v690
        %v692 = vpop.f32.mrb[0].mxu0
        %v693 = vadd.f32 0.0, %v692
        %694 = vdwg.mxu0
        %v695 = vld [vmem:[%s0] sm:$0xf]
        %697 = vset.pattern.permute.xlu0 0
        %698 = vperm.xlu0 %697, %v695
        %v699 = vpop.permute.xlu0 %698
        %v702 = vmul.f32 %v699, %v344
        %v703 = vmul.f32 %v699, %v471
        %v704 = vadd.f32 %v702, %v691
        %v705 = vadd.f32 %v703, %v693
        %v708 = vcombine.low %v704, %v705
        %vm710 = vcmask 523268
        %vm711 = vmor %vm710, %vm485
        %712 = vst.msk [vmem:[%s322] sm:$0xff] %vm711, %v708
        %s713 = sand.u32 %s204, 1
        %s714 = scalar_lea.sflag [#allocation3], %s713
        %s715 = sand.u32 %s204, 1
        %s716 = smul.addr %s715, 8
        %s717 = scalar_lea.vmem [#allocation2], %s716
        // Predicated region
        $region49: #{tpu_custom_call.1} parent=47 // pred_check
          %p718 = pneg %p214
        $region50: #{tpu_custom_call.1} parent=47 // pred_check_branch
          %720 = sbr.rel (%p718) target = $region52
        $region51: #{tpu_custom_call.1} parent=47 // pred_region
          %s721 = smul.u32 2, %s26
          %s723 = ssub.s32 128, 128
          %724 = vsyncadd %s714, %s723
          %s725 = smul.addr %s25, 2
          %s726 = sadd.s32 %s721, %s725
          %s727 = smul.addr %s726, 64
          %s728 = scalar_lea.hbm %s7, %s727
          %s730 = sshll.u32 %s717, 4
          %s731 = int_to_ptr.vmem [resolvable:$true] %s730
          %733 = dma.vmem_to_hbm [thread:$0]  %s731, 128, %s728, %s714
        $region52: #{tpu_custom_call.1} parent=47 // pred_fallthru
          _
      $region48: #{tpu_custom_call.1} parent=5 // pred_fallthru
        _
      %p734 = scmp.le.s32.totalorder 2, %s16
      // Predicated region
      $region53: #{tpu_custom_call.1} parent=5 // pred_check
        %p735 = pneg %p734
      $region54: #{tpu_custom_call.1} parent=5 // pred_check_branch
        %737 = sbr.rel (%p735) target = $region56
      $region55: #{tpu_custom_call.1} parent=5 // pred_region
        %s738 = ssub.s32 %s16, 2
        // Predicated region
        $region57: #{tpu_custom_call.1} parent=55 // pred_check
          %p739 = pneg %p220
        $region58: #{tpu_custom_call.1} parent=55 // pred_check_branch
          %741 = sbr.rel (%p739) target = $region60
        $region59: #{tpu_custom_call.1} parent=55 // pred_region
          %s742 = sand.u32 %s205, 1
          %s743 = scalar_lea.sflag [#allocation3], %s742
          %s744 = sand.u32 %s205, 1
          %s745 = smul.addr %s744, 8
          %s746 = scalar_lea.vmem [#allocation2], %s745
          %747 = dma.done %s743, 128
        $region60: #{tpu_custom_call.1} parent=55 // pred_fallthru
          _
      $region56: #{tpu_custom_call.1} parent=5 // pred_fallthru
        _
    $region6: #{tpu_custom_call.1} parent=1 // loop_footer
      %s20 = sadd.s32 1, %s16
    $region7: #{tpu_custom_call.1} parent=1 // loop_footer_branch
      %15 = sbr.rel target = $region3
    $region8: #{tpu_custom_call.1} parent=1 // loop_exit
      _
    %748 = vsyncpa [#allocation3], 1
    %s749 = scalar_lea.sflag [#allocation3], 1
    %750 = vsyncpa %s749, 1

</llo_original>
